<compile_context>
chip_gen: v5e
topology: v5e:2x2
jax: 0.10.0
libtpu: 0.0.40
codegen_flags: <defaults>
</compile_context>

<pallas_src>
import jax
import jax.numpy as jnp
import numpy as np
from jax.experimental import pallas as pl
from jax.experimental.pallas import tpu as pltpu


# ----------------------------- Pallas kernel ----------------------------- #

def bio_text_head_kernel(text_ref, pos_ref, w_ref, o_ref):
    """out_tile = (text_e + positional_embedding) @ W_tile.

    text_ref, pos_ref: (B, 768) full blocks (VPU add).
    w_ref:             (768, tn) weight tile (already transposed from PyTorch (N, 768)).
    o_ref:             (B, tn) lane-dense output tile (tn is a multiple of 128).
    """
    x = text_ref[...] + pos_ref[...]
    o_ref[...] = jnp.dot(
        x, w_ref[...], preferred_element_type=jnp.float32
    ).astype(o_ref.dtype)


def bio_text_head_pallas(text_e, pos_emb, w_proj_t, *, tn=256):
    """text_e: (B, 768); pos_emb: (B, 768); w_proj_t: (768, N) -> (B, N)."""
    B, H = text_e.shape
    N = w_proj_t.shape[1]
    tn = min(tn, N)
    assert N % tn == 0, f"N={N} must be divisible by tile size tn={tn}"
    assert tn % 128 == 0, "keep the output lane-dense (tn multiple of 128)"

    cost = pl.CostEstimate(
        flops=2 * B * H * N + B * H,
        transcendentals=0,
        bytes_accessed=4 * (text_e.size + pos_emb.size + w_proj_t.size + B * N),
    )

    return pl.pallas_call(
        bio_text_head_kernel,
        out_shape=jax.ShapeDtypeStruct((B, N), text_e.dtype),
        grid_spec=pltpu.PrefetchScalarGridSpec(
            num_scalar_prefetch=0,
            grid=(N // tn,),
            in_specs=[
                pl.BlockSpec((B, H), lambda j: (0, 0)),     # activations: full block, loaded once
                pl.BlockSpec((B, H), lambda j: (0, 0)),     # positional embedding: full block
                pl.BlockSpec((H, tn), lambda j: (0, j)),    # weight tile: full K, lane-dense cols
            ],
            out_specs=pl.BlockSpec((B, tn), lambda j: (0, j)),
        ),
        compiler_params=pltpu.CompilerParams(
            dimension_semantics=("parallel",),
        ),
        cost_estimate=cost,
    )(text_e, pos_emb, w_proj_t)


# ------------------------------- Wrapper ---------------------------------- #

def bio_text_encoder_forward(pooler_output, positional_embedding, w_proj):
    """Matches BioTextEncoder.forward after the frozen BERT encoder.

    pooler_output:        (B, 768)   stand-in for text_outputs.pooler_output
    positional_embedding: (B, 768)   nn.Parameter
    w_proj:               (N, 768)   nn.Linear(768, N, bias=False).weight (PyTorch layout)
    returns:              (B, N)
    """
    w_t = jnp.transpose(w_proj)  # (768, N) so the kernel output is (B, N) lane-dense
    return bio_text_head_pallas(pooler_output, positional_embedding, w_t)


# ------------------------------ Reference --------------------------------- #

def reference_forward(pooler_output, positional_embedding, w_proj):
    text_e = pooler_output + positional_embedding
    return jnp.dot(text_e, w_proj.T)


# --------------------------------- Main ------------------------------------ #

if __name__ == "__main__":
    B = 2          # B=2 text prompts (matches module default B=2)
    HIDDEN = 768   # fixed by Bio_ClinicalBERT hidden size
    N = 256        # projection_head output dim (multiple of 128 -> lane-dense stores)

    key = jax.random.PRNGKey(0)
    k1, k2, k3 = jax.random.split(key, 3)

    # Stand-in for the frozen BERT pooler output (see TODO above).
    pooler_output = jax.random.normal(k1, (B, HIDDEN), dtype=jnp.float32)
    # nn.init.normal_(self.positional_embedding, std=0.01)
    positional_embedding = 0.01 * jax.random.normal(k2, (B, HIDDEN), dtype=jnp.float32)
    # nn.Linear(768, N, bias=False) default init: U(-1/sqrt(768), 1/sqrt(768)), weight shape (N, 768)
    bound = 1.0 / np.sqrt(HIDDEN)
    w_proj = jax.random.uniform(k3, (N, HIDDEN), minval=-bound, maxval=bound,
                                dtype=jnp.float32)

    out = jax.block_until_ready(
        bio_text_encoder_forward(pooler_output, positional_embedding, w_proj))
    ref = jax.block_until_ready(
        reference_forward(pooler_output, positional_embedding, w_proj))

    np.testing.assert_allclose(np.asarray(out), np.asarray(ref), rtol=1e-5, atol=1e-5)
    assert out.shape == (B, N)

    print("KERNEL_OK")
</pallas_src>

<mosaic_0001>
module attributes {stable_mosaic.version = 11 : i64} {
  func.func @bio_text_head_kernel(%arg0: i32, %arg1: memref<2x768xf32, #tpu.memory_space<vmem>>, %arg2: memref<2x768xf32, #tpu.memory_space<vmem>>, %arg3: memref<768x256xf32, #tpu.memory_space<vmem>>, %arg4: memref<2x256xf32, #tpu.memory_space<vmem>>) attributes {dimension_semantics = [#tpu.dimension_semantics<parallel>], iteration_bounds = array<i64: 1>, scalar_prefetch = 0 : i64, scratch_operands = 0 : i64, tpu.core_type = #tpu.core_type<tc>, window_params = [{pipeline_mode = #tpu.pipeline_mode<synchronous>, transform_indices = @transform_0, window_bounds = array<i64: 2, 768>}, {pipeline_mode = #tpu.pipeline_mode<synchronous>, transform_indices = @transform_1, window_bounds = array<i64: 2, 768>}, {transform_indices = @transform_2, window_bounds = array<i64: 768, 256>}, {transform_indices = @transform_3, window_bounds = array<i64: 2, 256>}]} {
    %c0 = arith.constant 0 : index
    %c0_0 = arith.constant 0 : index
    %0 = vector.load %arg1[%c0, %c0_0] : memref<2x768xf32, #tpu.memory_space<vmem>>, vector<2x768xf32>
    %c0_1 = arith.constant 0 : index
    %c0_2 = arith.constant 0 : index
    %1 = vector.load %arg2[%c0_1, %c0_2] : memref<2x768xf32, #tpu.memory_space<vmem>>, vector<2x768xf32>
    %2 = arith.addf %0, %1 : vector<2x768xf32>
    %c0_3 = arith.constant 0 : index
    %c0_4 = arith.constant 0 : index
    %3 = vector.load %arg3[%c0_3, %c0_4] : memref<768x256xf32, #tpu.memory_space<vmem>>, vector<768x256xf32>
    %cst = arith.constant dense<0.000000e+00> : vector<2x256xf32>
    %4 = tpu.matmul %2, %3, %cst {dimension_numbers = #tpu.dot_dimension_numbers<[1], [0], [0], [1], [0, 0, 1, 1], [], []>} : vector<2x768xf32>, vector<768x256xf32>, vector<2x256xf32> -> vector<2x256xf32>
    %c0_5 = arith.constant 0 : index
    %c0_6 = arith.constant 0 : index
    %5 = vector.load %arg4[%c0_5, %c0_6] : memref<2x256xf32, #tpu.memory_space<vmem>>, vector<2x256xf32>
    tpu.vector_store %arg4[%c0_5, %c0_6], %4 {strides = array<i32>} : memref<2x256xf32, #tpu.memory_space<vmem>>, vector<2x256xf32>,
    return
  }
  func.func @transform_0(%arg0: i32) -> (i32, i32) {
    %c0_i32 = arith.constant 0 : i32
    %c0_i32_0 = arith.constant 0 : i32
    %c0_i32_1 = arith.constant 0 : i32
    return %c0_i32, %c0_i32_0 : i32, i32
  }
  func.func @transform_1(%arg0: i32) -> (i32, i32) {
    %c0_i32 = arith.constant 0 : i32
    %c0_i32_0 = arith.constant 0 : i32
    %c0_i32_1 = arith.constant 0 : i32
    return %c0_i32, %c0_i32_0 : i32, i32
  }
  func.func @transform_2(%arg0: i32) -> (i32, i32) {
    %c0_i32 = arith.constant 0 : i32
    %c0_i32_0 = arith.constant 0 : i32
    return %c0_i32, %arg0 : i32, i32
  }
  func.func @transform_3(%arg0: i32) -> (i32, i32) {
    %c0_i32 = arith.constant 0 : i32
    %c0_i32_0 = arith.constant 0 : i32
    return %c0_i32, %arg0 : i32, i32
  }
}

</mosaic_0001>

<llo_original>
// kernel: tpu_custom_call.1
$region0: #{tpu_custom_call.1}
  #allocation0 [shape = 'u32[]', space=smem, size = 0x4, offset = 0x4, fixed_abs, tag = 'smem constant byte address 0x4 - core index']
  #allocation1 [shape = 'u32[72,128]{1,0:T(1,128)}', space=vmem, size = 0x9000, scoped, tag = 'internal scratch']
  %s0 = inlined_call_operand.hbm [shape: f32[2,768], index: 0, kind: input, shape index: {}]
  %s1 = inlined_call_operand.hbm [shape: f32[2,768], index: 1, kind: input, shape index: {}]
  %s2 = inlined_call_operand.hbm [shape: f32[768,256], index: 2, kind: input, shape index: {}]
  %s3 = inlined_call_operand.hbm [shape: f32[2,256], index: 3, kind: output, shape index: {}]
  %s4 = sld [smem:[#allocation0]]
  $region34: #{tpu_custom_call.1} parent=0
    _
  %s6 = ssub.s32 1, %s4
  %s7 = scalar_select 0, %s6, %s4
  $region1: #{tpu_custom_call.1} parent=0
    #allocation2 [shape = 'u8[6144]{0}', space=vmem, size = 0x1800, scoped, tag = 'input window, operand 0, single buffered']
    #allocation3 [shape = 's32[1]{0}', space=sflag, size = 0x4, scoped, tag = 'scoped memory for tpu_custom_call.1']
    #allocation4 [shape = 's32[1]{0}', space=sflag, size = 0x4, scoped, tag = 'scoped memory for tpu_custom_call.1']
    #allocation5 [shape = 'u8[6144]{0}', space=vmem, size = 0x1800, scoped, tag = 'input window, operand 1, single buffered']
    #allocation6 [shape = 's32[1]{0}', space=sflag, size = 0x4, scoped, tag = 'scoped memory for tpu_custom_call.1']
    #allocation7 [shape = 'u8[786432]{0}', space=vmem, size = 0xc0000, scoped, tag = 'input window, operand 2, single buffered']
    #allocation8 [shape = 'u8[2048]{0}', space=vmem, size = 0x800, scoped, tag = 'output window, operand 0, single buffered']
    %8 = vsyncpa [#allocation3], 0
    %9 = vsyncpa [#allocation6], 0
    %10 = vsyncpa [#allocation4], 0
    // Predicated region
    $region2: #{tpu_custom_call.1} parent=1 // pred_check
      _
    $region3: #{tpu_custom_call.1} parent=1 // pred_check_branch
      %12 = sbr.rel (0) target = $region5
    $region4: #{tpu_custom_call.1} parent=1 // pred_region
      %14 = vsyncadd [#allocation3], 0
      %s16 = sshll.u32 %s0, 4
      %s17 = int_to_ptr.hbm [resolvable:$true] %s16
      %s18 = sshll.u32 [#allocation2], 4
      %s19 = int_to_ptr.vmem [resolvable:$true] %s18
      %21 = dma.hbm_to_vmem [thread:$0]  %s17, 192, %s19, [#allocation3]
    $region5: #{tpu_custom_call.1} parent=1 // pred_fallthru
      _
    // Predicated region
    $region6: #{tpu_custom_call.1} parent=1 // pred_check
      _
    $region7: #{tpu_custom_call.1} parent=1 // pred_check_branch
      %23 = sbr.rel (0) target = $region9
    $region8: #{tpu_custom_call.1} parent=1 // pred_region
      %25 = vsyncadd [#allocation6], 0
      %s27 = sshll.u32 %s1, 4
      %s28 = int_to_ptr.hbm [resolvable:$true] %s27
      %s29 = sshll.u32 [#allocation5], 4
      %s30 = int_to_ptr.vmem [resolvable:$true] %s29
      %32 = dma.hbm_to_vmem [thread:$0]  %s28, 192, %s30, [#allocation6]
    $region9: #{tpu_custom_call.1} parent=1 // pred_fallthru
      _
    // Predicated region
    $region10: #{tpu_custom_call.1} parent=1 // pred_check
      _
    $region11: #{tpu_custom_call.1} parent=1 // pred_check_branch
      %34 = sbr.rel (0) target = $region13
    $region12: #{tpu_custom_call.1} parent=1 // pred_region
      %36 = vsyncadd [#allocation6], 0
      %s37 = sshll.u32 %s2, 4
      %s38 = int_to_ptr.hbm [resolvable:$true] %s37
      %s39 = sshll.u32 [#allocation7], 4
      %s40 = int_to_ptr.vmem [resolvable:$true] %s39
      %45 = dma.hbm_to_vmem [thread:$0]  %s38, 24576, %s40, [#allocation6], 256, 256, 16
    $region13: #{tpu_custom_call.1} parent=1 // pred_fallthru
      _
    // Predicated region
    $region14: #{tpu_custom_call.1} parent=1 // pred_check
      _
    $region15: #{tpu_custom_call.1} parent=1 // pred_check_branch
      %47 = sbr.rel (0) target = $region17
    $region16: #{tpu_custom_call.1} parent=1 // pred_region
      %49 = dma.done [#allocation3], 192
    $region17: #{tpu_custom_call.1} parent=1 // pred_fallthru
      _
    // Predicated region
    $region18: #{tpu_custom_call.1} parent=1 // pred_check
      _
    $region19: #{tpu_custom_call.1} parent=1 // pred_check_branch
      %51 = sbr.rel (0) target = $region21
    $region20: #{tpu_custom_call.1} parent=1 // pred_region
      %53 = dma.done [#allocation6], 192
    $region21: #{tpu_custom_call.1} parent=1 // pred_fallthru
      _
    // Predicated region
    $region22: #{tpu_custom_call.1} parent=1 // pred_check
      _
    $region23: #{tpu_custom_call.1} parent=1 // pred_check_branch
      %55 = sbr.rel (0) target = $region25
    $region24: #{tpu_custom_call.1} parent=1 // pred_region
      %57 = dma.done [#allocation6], 24576
    $region25: #{tpu_custom_call.1} parent=1 // pred_fallthru
      _
    %v58 = vld [vmem:[#allocation2] sm:$0xff]
    %v59 = vld [vmem:[#allocation2 + $0x8] sm:$0xf]
    %v60 = vld [vmem:[#allocation5] sm:$0xff]
    %v61 = vld [vmem:[#allocation5 + $0x8] sm:$0xf]
    %v62 = vadd.f32 %v58, %v60
    %v63 = vadd.f32 %v59, %v61
    %v64 = vld [vmem:[#allocation7] sm:$0xff]
    %v65 = vld [vmem:[#allocation7 + $0x8] sm:$0xff]
    %v66 = vld [vmem:[#allocation7 + $0x10] sm:$0xff]
    %v67 = vld [vmem:[#allocation7 + $0x18] sm:$0xff]
    %v68 = vld [vmem:[#allocation7 + $0x20] sm:$0xff]
    %v69 = vld [vmem:[#allocation7 + $0x28] sm:$0xff]
    %v70 = vld [vmem:[#allocation7 + $0x30] sm:$0xff]
    %v71 = vld [vmem:[#allocation7 + $0x38] sm:$0xff]
    %v72 = vld [vmem:[#allocation7 + $0x40] sm:$0xff]
    %v73 = vld [vmem:[#allocation7 + $0x48] sm:$0xff]
    %v74 = vld [vmem:[#allocation7 + $0x50] sm:$0xff]
    %v75 = vld [vmem:[#allocation7 + $0x58] sm:$0xff]
    %v76 = vld [vmem:[#allocation7 + $0x60] sm:$0xff]
    %v77 = vld [vmem:[#allocation7 + $0x68] sm:$0xff]
    %v78 = vld [vmem:[#allocation7 + $0x70] sm:$0xff]
    %v79 = vld [vmem:[#allocation7 + $0x78] sm:$0xff]
    %v80 = vld [vmem:[#allocation7 + $0x80] sm:$0xff]
    %v81 = vld [vmem:[#allocation7 + $0x88] sm:$0xff]
    %v82 = vld [vmem:[#allocation7 + $0x90] sm:$0xff]
    %v83 = vld [vmem:[#allocation7 + $0x98] sm:$0xff]
    %v84 = vld [vmem:[#allocation7 + $0xa0] sm:$0xff]
    %v85 = vld [vmem:[#allocation7 + $0xa8] sm:$0xff]
    %v86 = vld [vmem:[#allocation7 + $0xb0] sm:$0xff]
    %v87 = vld [vmem:[#allocation7 + $0xb8] sm:$0xff]
    %v88 = vld [vmem:[#allocation7 + $0xc0] sm:$0xff]
    %v89 = vld [vmem:[#allocation7 + $0xc8] sm:$0xff]
    %v90 = vld [vmem:[#allocation7 + $0xd0] sm:$0xff]
    %v91 = vld [vmem:[#allocation7 + $0xd8] sm:$0xff]
    %v92 = vld [vmem:[#allocation7 + $0xe0] sm:$0xff]
    %v93 = vld [vmem:[#allocation7 + $0xe8] sm:$0xff]
    %v94 = vld [vmem:[#allocation7 + $0xf0] sm:$0xff]
    %v95 = vld [vmem:[#allocation7 + $0xf8] sm:$0xff]
    %v96 = vld [vmem:[#allocation7 + $0x100] sm:$0xff]
    %v97 = vld [vmem:[#allocation7 + $0x108] sm:$0xff]
    %v98 = vld [vmem:[#allocation7 + $0x110] sm:$0xff]
    %v99 = vld [vmem:[#allocation7 + $0x118] sm:$0xff]
    %v100 = vld [vmem:[#allocation7 + $0x120] sm:$0xff]
    %v101 = vld [vmem:[#allocation7 + $0x128] sm:$0xff]
    %v102 = vld [vmem:[#allocation7 + $0x130] sm:$0xff]
    %v103 = vld [vmem:[#allocation7 + $0x138] sm:$0xff]
    %v104 = vld [vmem:[#allocation7 + $0x140] sm:$0xff]
    %v105 = vld [vmem:[#allocation7 + $0x148] sm:$0xff]
    %v106 = vld [vmem:[#allocation7 + $0x150] sm:$0xff]
    %v107 = vld [vmem:[#allocation7 + $0x158] sm:$0xff]
    %v108 = vld [vmem:[#allocation7 + $0x160] sm:$0xff]
    %v109 = vld [vmem:[#allocation7 + $0x168] sm:$0xff]
    %v110 = vld [vmem:[#allocation7 + $0x170] sm:$0xff]
    %v111 = vld [vmem:[#allocation7 + $0x178] sm:$0xff]
    %v112 = vld [vmem:[#allocation7 + $0x180] sm:$0xff]
    %v113 = vld [vmem:[#allocation7 + $0x188] sm:$0xff]
    %v114 = vld [vmem:[#allocation7 + $0x190] sm:$0xff]
    %v115 = vld [vmem:[#allocation7 + $0x198] sm:$0xff]
    %v116 = vld [vmem:[#allocation7 + $0x1a0] sm:$0xff]
    %v117 = vld [vmem:[#allocation7 + $0x1a8] sm:$0xff]
    %v118 = vld [vmem:[#allocation7 + $0x1b0] sm:$0xff]
    %v119 = vld [vmem:[#allocation7 + $0x1b8] sm:$0xff]
    %v120 = vld [vmem:[#allocation7 + $0x1c0] sm:$0xff]
    %v121 = vld [vmem:[#allocation7 + $0x1c8] sm:$0xff]
    %v122 = vld [vmem:[#allocation7 + $0x1d0] sm:$0xff]
    %v123 = vld [vmem:[#allocation7 + $0x1d8] sm:$0xff]
    %v124 = vld [vmem:[#allocation7 + $0x1e0] sm:$0xff]
    %v125 = vld [vmem:[#allocation7 + $0x1e8] sm:$0xff]
    %v126 = vld [vmem:[#allocation7 + $0x1f0] sm:$0xff]
    %v127 = vld [vmem:[#allocation7 + $0x1f8] sm:$0xff]
    %v128 = vld [vmem:[#allocation7 + $0x200] sm:$0xff]
    %v129 = vld [vmem:[#allocation7 + $0x208] sm:$0xff]
    %v130 = vld [vmem:[#allocation7 + $0x210] sm:$0xff]
    %v131 = vld [vmem:[#allocation7 + $0x218] sm:$0xff]
    %v132 = vld [vmem:[#allocation7 + $0x220] sm:$0xff]
    %v133 = vld [vmem:[#allocation7 + $0x228] sm:$0xff]
    %v134 = vld [vmem:[#allocation7 + $0x230] sm:$0xff]
    %v135 = vld [vmem:[#allocation7 + $0x238] sm:$0xff]
    %v136 = vld [vmem:[#allocation7 + $0x240] sm:$0xff]
    %v137 = vld [vmem:[#allocation7 + $0x248] sm:$0xff]
    %v138 = vld [vmem:[#allocation7 + $0x250] sm:$0xff]
    %v139 = vld [vmem:[#allocation7 + $0x258] sm:$0xff]
    %v140 = vld [vmem:[#allocation7 + $0x260] sm:$0xff]
    %v141 = vld [vmem:[#allocation7 + $0x268] sm:$0xff]
    %v142 = vld [vmem:[#allocation7 + $0x270] sm:$0xff]
    %v143 = vld [vmem:[#allocation7 + $0x278] sm:$0xff]
    %v144 = vld [vmem:[#allocation7 + $0x280] sm:$0xff]
    %v145 = vld [vmem:[#allocation7 + $0x288] sm:$0xff]
    %v146 = vld [vmem:[#allocation7 + $0x290] sm:$0xff]
    %v147 = vld [vmem:[#allocation7 + $0x298] sm:$0xff]
    %v148 = vld [vmem:[#allocation7 + $0x2a0] sm:$0xff]
    %v149 = vld [vmem:[#allocation7 + $0x2a8] sm:$0xff]
    %v150 = vld [vmem:[#allocation7 + $0x2b0] sm:$0xff]
    %v151 = vld [vmem:[#allocation7 + $0x2b8] sm:$0xff]
    %v152 = vld [vmem:[#allocation7 + $0x2c0] sm:$0xff]
    %v153 = vld [vmem:[#allocation7 + $0x2c8] sm:$0xff]
    %v154 = vld [vmem:[#allocation7 + $0x2d0] sm:$0xff]
    %v155 = vld [vmem:[#allocation7 + $0x2d8] sm:$0xff]
    %v156 = vld [vmem:[#allocation7 + $0x2e0] sm:$0xff]
    %v157 = vld [vmem:[#allocation7 + $0x2e8] sm:$0xff]
    %v158 = vld [vmem:[#allocation7 + $0x2f0] sm:$0xff]
    %v159 = vld [vmem:[#allocation7 + $0x2f8] sm:$0xff]
    %v160 = vld [vmem:[#allocation7 + $0x300] sm:$0xff]
    %v161 = vld [vmem:[#allocation7 + $0x308] sm:$0xff]
    %v162 = vld [vmem:[#allocation7 + $0x310] sm:$0xff]
    %v163 = vld [vmem:[#allocation7 + $0x318] sm:$0xff]
    %v164 = vld [vmem:[#allocation7 + $0x320] sm:$0xff]
    %v165 = vld [vmem:[#allocation7 + $0x328] sm:$0xff]
    %v166 = vld [vmem:[#allocation7 + $0x330] sm:$0xff]
    %v167 = vld [vmem:[#allocation7 + $0x338] sm:$0xff]
    %v168 = vld [vmem:[#allocation7 + $0x340] sm:$0xff]
    %v169 = vld [vmem:[#allocation7 + $0x348] sm:$0xff]
    %v170 = vld [vmem:[#allocation7 + $0x350] sm:$0xff]
    %v171 = vld [vmem:[#allocation7 + $0x358] sm:$0xff]
    %v172 = vld [vmem:[#allocation7 + $0x360] sm:$0xff]
    %v173 = vld [vmem:[#allocation7 + $0x368] sm:$0xff]
    %v174 = vld [vmem:[#allocation7 + $0x370] sm:$0xff]
    %v175 = vld [vmem:[#allocation7 + $0x378] sm:$0xff]
    %v176 = vld [vmem:[#allocation7 + $0x380] sm:$0xff]
    %v177 = vld [vmem:[#allocation7 + $0x388] sm:$0xff]
    %v178 = vld [vmem:[#allocation7 + $0x390] sm:$0xff]
    %v179 = vld [vmem:[#allocation7 + $0x398] sm:$0xff]
    %v180 = vld [vmem:[#allocation7 + $0x3a0] sm:$0xff]
    %v181 = vld [vmem:[#allocation7 + $0x3a8] sm:$0xff]
    %v182 = vld [vmem:[#allocation7 + $0x3b0] sm:$0xff]
    %v183 = vld [vmem:[#allocation7 + $0x3b8] sm:$0xff]
    %v184 = vld [vmem:[#allocation7 + $0x3c0] sm:$0xff]
    %v185 = vld [vmem:[#allocation7 + $0x3c8] sm:$0xff]
    %v186 = vld [vmem:[#allocation7 + $0x3d0] sm:$0xff]
    %v187 = vld [vmem:[#allocation7 + $0x3d8] sm:$0xff]
    %v188 = vld [vmem:[#allocation7 + $0x3e0] sm:$0xff]
    %v189 = vld [vmem:[#allocation7 + $0x3e8] sm:$0xff]
    %v190 = vld [vmem:[#allocation7 + $0x3f0] sm:$0xff]
    %v191 = vld [vmem:[#allocation7 + $0x3f8] sm:$0xff]
    %v192 = vld [vmem:[#allocation7 + $0x400] sm:$0xff]
    %v193 = vld [vmem:[#allocation7 + $0x408] sm:$0xff]
    %v194 = vld [vmem:[#allocation7 + $0x410] sm:$0xff]
    %v195 = vld [vmem:[#allocation7 + $0x418] sm:$0xff]
    %v196 = vld [vmem:[#allocation7 + $0x420] sm:$0xff]
    %v197 = vld [vmem:[#allocation7 + $0x428] sm:$0xff]
    %v198 = vld [vmem:[#allocation7 + $0x430] sm:$0xff]
    %v199 = vld [vmem:[#allocation7 + $0x438] sm:$0xff]
    %v200 = vld [vmem:[#allocation7 + $0x440] sm:$0xff]
    %v201 = vld [vmem:[#allocation7 + $0x448] sm:$0xff]
    %v202 = vld [vmem:[#allocation7 + $0x450] sm:$0xff]
    %v203 = vld [vmem:[#allocation7 + $0x458] sm:$0xff]
    %v204 = vld [vmem:[#allocation7 + $0x460] sm:$0xff]
    %v205 = vld [vmem:[#allocation7 + $0x468] sm:$0xff]
    %v206 = vld [vmem:[#allocation7 + $0x470] sm:$0xff]
    %v207 = vld [vmem:[#allocation7 + $0x478] sm:$0xff]
    %v208 = vld [vmem:[#allocation7 + $0x480] sm:$0xff]
    %v209 = vld [vmem:[#allocation7 + $0x488] sm:$0xff]
    %v210 = vld [vmem:[#allocation7 + $0x490] sm:$0xff]
    %v211 = vld [vmem:[#allocation7 + $0x498] sm:$0xff]
    %v212 = vld [vmem:[#allocation7 + $0x4a0] sm:$0xff]
    %v213 = vld [vmem:[#allocation7 + $0x4a8] sm:$0xff]
    %v214 = vld [vmem:[#allocation7 + $0x4b0] sm:$0xff]
    %v215 = vld [vmem:[#allocation7 + $0x4b8] sm:$0xff]
    %v216 = vld [vmem:[#allocation7 + $0x4c0] sm:$0xff]
    %v217 = vld [vmem:[#allocation7 + $0x4c8] sm:$0xff]
    %v218 = vld [vmem:[#allocation7 + $0x4d0] sm:$0xff]
    %v219 = vld [vmem:[#allocation7 + $0x4d8] sm:$0xff]
    %v220 = vld [vmem:[#allocation7 + $0x4e0] sm:$0xff]
    %v221 = vld [vmem:[#allocation7 + $0x4e8] sm:$0xff]
    %v222 = vld [vmem:[#allocation7 + $0x4f0] sm:$0xff]
    %v223 = vld [vmem:[#allocation7 + $0x4f8] sm:$0xff]
    %v224 = vld [vmem:[#allocation7 + $0x500] sm:$0xff]
    %v225 = vld [vmem:[#allocation7 + $0x508] sm:$0xff]
    %v226 = vld [vmem:[#allocation7 + $0x510] sm:$0xff]
    %v227 = vld [vmem:[#allocation7 + $0x518] sm:$0xff]
    %v228 = vld [vmem:[#allocation7 + $0x520] sm:$0xff]
    %v229 = vld [vmem:[#allocation7 + $0x528] sm:$0xff]
    %v230 = vld [vmem:[#allocation7 + $0x530] sm:$0xff]
    %v231 = vld [vmem:[#allocation7 + $0x538] sm:$0xff]
    %v232 = vld [vmem:[#allocation7 + $0x540] sm:$0xff]
    %v233 = vld [vmem:[#allocation7 + $0x548] sm:$0xff]
    %v234 = vld [vmem:[#allocation7 + $0x550] sm:$0xff]
    %v235 = vld [vmem:[#allocation7 + $0x558] sm:$0xff]
    %v236 = vld [vmem:[#allocation7 + $0x560] sm:$0xff]
    %v237 = vld [vmem:[#allocation7 + $0x568] sm:$0xff]
    %v238 = vld [vmem:[#allocation7 + $0x570] sm:$0xff]
    %v239 = vld [vmem:[#allocation7 + $0x578] sm:$0xff]
    %v240 = vld [vmem:[#allocation7 + $0x580] sm:$0xff]
    %v241 = vld [vmem:[#allocation7 + $0x588] sm:$0xff]
    %v242 = vld [vmem:[#allocation7 + $0x590] sm:$0xff]
    %v243 = vld [vmem:[#allocation7 + $0x598] sm:$0xff]
    %v244 = vld [vmem:[#allocation7 + $0x5a0] sm:$0xff]
    %v245 = vld [vmem:[#allocation7 + $0x5a8] sm:$0xff]
    %v246 = vld [vmem:[#allocation7 + $0x5b0] sm:$0xff]
    %v247 = vld [vmem:[#allocation7 + $0x5b8] sm:$0xff]
    %v248 = vld [vmem:[#allocation7 + $0x5c0] sm:$0xff]
    %v249 = vld [vmem:[#allocation7 + $0x5c8] sm:$0xff]
    %v250 = vld [vmem:[#allocation7 + $0x5d0] sm:$0xff]
    %v251 = vld [vmem:[#allocation7 + $0x5d8] sm:$0xff]
    %v252 = vld [vmem:[#allocation7 + $0x5e0] sm:$0xff]
    %v253 = vld [vmem:[#allocation7 + $0x5e8] sm:$0xff]
    %v254 = vld [vmem:[#allocation7 + $0x5f0] sm:$0xff]
    %v255 = vld [vmem:[#allocation7 + $0x5f8] sm:$0xff]
    %258 = vst [vmem:[#allocation1] ss:$4 sm:$0xff] %v62
    %s259 = scalar_lea.vmem [#allocation1], 32
    %260 = vst [vmem:[%s259] ss:$4 sm:$0xff] %v63
    %v261 = vld.sshfl [vmem:[#allocation1] sm:$0xff pattern:$0x73625140]
    %v262 = vld.sshfl [vmem:[#allocation1 + $0x8] sm:$0xff pattern:$0x73625140]
    %v263 = vld.sshfl [vmem:[#allocation1 + $0x10] sm:$0xff pattern:$0x73625140]
    %v264 = vld.sshfl [vmem:[#allocation1 + $0x18] sm:$0xff pattern:$0x73625140]
    %v265 = vld.sshfl [vmem:[#allocation1 + $0x20] sm:$0xff pattern:$0x73625140]
    %v266 = vld.sshfl [vmem:[#allocation1 + $0x28] sm:$0xff pattern:$0x73625140]
    %273 = vmatpush.msra.mxu0 %v94
    %274 = vmatpush.msra.mxu0 %v92
    %275 = vmatpush.msra.mxu0 %v90
    %276 = vmatpush.msra.mxu0 %v88
    %277 = vmatpush.msra.mxu0 %v86
    %278 = vmatpush.msra.mxu0 %v84
    %279 = vmatpush.msra.mxu0 %v82
    %280 = vmatpush.msra.mxu0 %v80
    %281 = vmatpush.msra.mxu0 %v78
    %282 = vmatpush.msra.mxu0 %v76
    %283 = vmatpush.msra.mxu0 %v74
    %284 = vmatpush.msra.mxu0 %v72
    %285 = vmatpush.msra.mxu0 %v70
    %286 = vmatpush.msra.mxu0 %v68
    %287 = vmatpush.msra.mxu0 %v66
    %288 = vmatpush.msra.mxu0 %v64
    %289 = vmatmul.f32.gmra.mxu0 %v261
    %v290 = vpop.f32.mrf.mxu0
    %v291 = vadd.f32 0.0, %v290
    %292 = vdwg.mxu0
    %293 = vmatpush.msra.mxu0 %v126
    %294 = vmatpush.msra.mxu0 %v124
    %295 = vmatpush.msra.mxu0 %v122
    %296 = vmatpush.msra.mxu0 %v120
    %297 = vmatpush.msra.mxu0 %v118
    %298 = vmatpush.msra.mxu0 %v116
    %299 = vmatpush.msra.mxu0 %v114
    %300 = vmatpush.msra.mxu0 %v112
    %301 = vmatpush.msra.mxu0 %v110
    %302 = vmatpush.msra.mxu0 %v108
    %303 = vmatpush.msra.mxu0 %v106
    %304 = vmatpush.msra.mxu0 %v104
    %305 = vmatpush.msra.mxu0 %v102
    %306 = vmatpush.msra.mxu0 %v100
    %307 = vmatpush.msra.mxu0 %v98
    %308 = vmatpush.msra.mxu0 %v96
    %309 = vmatmul.f32.gmra.mxu0 %v262
    %v310 = vpop.f32.mrf.mxu0
    %v311 = vadd.f32 %v291, %v310
    %312 = vdwg.mxu0
    %313 = vmatpush.msra.mxu0 %v158
    %314 = vmatpush.msra.mxu0 %v156
    %315 = vmatpush.msra.mxu0 %v154
    %316 = vmatpush.msra.mxu0 %v152
    %317 = vmatpush.msra.mxu0 %v150
    %318 = vmatpush.msra.mxu0 %v148
    %319 = vmatpush.msra.mxu0 %v146
    %320 = vmatpush.msra.mxu0 %v144
    %321 = vmatpush.msra.mxu0 %v142
    %322 = vmatpush.msra.mxu0 %v140
    %323 = vmatpush.msra.mxu0 %v138
    %324 = vmatpush.msra.mxu0 %v136
    %325 = vmatpush.msra.mxu0 %v134
    %326 = vmatpush.msra.mxu0 %v132
    %327 = vmatpush.msra.mxu0 %v130
    %328 = vmatpush.msra.mxu0 %v128
    %329 = vmatmul.f32.gmra.mxu0 %v263
    %v330 = vpop.f32.mrf.mxu0
    %v331 = vadd.f32 %v311, %v330
    %332 = vdwg.mxu0
    %333 = vmatpush.msra.mxu0 %v190
    %334 = vmatpush.msra.mxu0 %v188
    %335 = vmatpush.msra.mxu0 %v186
    %336 = vmatpush.msra.mxu0 %v184
    %337 = vmatpush.msra.mxu0 %v182
    %338 = vmatpush.msra.mxu0 %v180
    %339 = vmatpush.msra.mxu0 %v178
    %340 = vmatpush.msra.mxu0 %v176
    %341 = vmatpush.msra.mxu0 %v174
    %342 = vmatpush.msra.mxu0 %v172
    %343 = vmatpush.msra.mxu0 %v170
    %344 = vmatpush.msra.mxu0 %v168
    %345 = vmatpush.msra.mxu0 %v166
    %346 = vmatpush.msra.mxu0 %v164
    %347 = vmatpush.msra.mxu0 %v162
    %348 = vmatpush.msra.mxu0 %v160
    %349 = vmatmul.f32.gmra.mxu0 %v264
    %v350 = vpop.f32.mrf.mxu0
    %v351 = vadd.f32 %v331, %v350
    %352 = vdwg.mxu0
    %353 = vmatpush.msra.mxu0 %v222
    %354 = vmatpush.msra.mxu0 %v220
    %355 = vmatpush.msra.mxu0 %v218
    %356 = vmatpush.msra.mxu0 %v216
    %357 = vmatpush.msra.mxu0 %v214
    %358 = vmatpush.msra.mxu0 %v212
    %359 = vmatpush.msra.mxu0 %v210
    %360 = vmatpush.msra.mxu0 %v208
    %361 = vmatpush.msra.mxu0 %v206
    %362 = vmatpush.msra.mxu0 %v204
    %363 = vmatpush.msra.mxu0 %v202
    %364 = vmatpush.msra.mxu0 %v200
    %365 = vmatpush.msra.mxu0 %v198
    %366 = vmatpush.msra.mxu0 %v196
    %367 = vmatpush.msra.mxu0 %v194
    %368 = vmatpush.msra.mxu0 %v192
    %369 = vmatmul.f32.gmra.mxu0 %v265
    %v370 = vpop.f32.mrf.mxu0
    %v371 = vadd.f32 %v351, %v370
    %372 = vdwg.mxu0
    %373 = vmatpush.msra.mxu0 %v254
    %374 = vmatpush.msra.mxu0 %v252
    %375 = vmatpush.msra.mxu0 %v250
    %376 = vmatpush.msra.mxu0 %v248
    %377 = vmatpush.msra.mxu0 %v246
    %378 = vmatpush.msra.mxu0 %v244
    %379 = vmatpush.msra.mxu0 %v242
    %380 = vmatpush.msra.mxu0 %v240
    %381 = vmatpush.msra.mxu0 %v238
    %382 = vmatpush.msra.mxu0 %v236
    %383 = vmatpush.msra.mxu0 %v234
    %384 = vmatpush.msra.mxu0 %v232
    %385 = vmatpush.msra.mxu0 %v230
    %386 = vmatpush.msra.mxu0 %v228
    %387 = vmatpush.msra.mxu0 %v226
    %388 = vmatpush.msra.mxu0 %v224
    %389 = vmatmul.f32.gmra.mxu0 %v266
    %v390 = vpop.f32.mrf.mxu0
    %v391 = vadd.f32 %v371, %v390
    %392 = vdwg.mxu0
    %393 = vmatpush.msra.mxu0 %v95
    %394 = vmatpush.msra.mxu0 %v93
    %395 = vmatpush.msra.mxu0 %v91
    %396 = vmatpush.msra.mxu0 %v89
    %397 = vmatpush.msra.mxu0 %v87
    %398 = vmatpush.msra.mxu0 %v85
    %399 = vmatpush.msra.mxu0 %v83
    %400 = vmatpush.msra.mxu0 %v81
    %401 = vmatpush.msra.mxu0 %v79
    %402 = vmatpush.msra.mxu0 %v77
    %403 = vmatpush.msra.mxu0 %v75
    %404 = vmatpush.msra.mxu0 %v73
    %405 = vmatpush.msra.mxu0 %v71
    %406 = vmatpush.msra.mxu0 %v69
    %407 = vmatpush.msra.mxu0 %v67
    %408 = vmatpush.msra.mxu0 %v65
    %409 = vmatmul.f32.gmra.mxu0 %v261
    %v410 = vpop.f32.mrf.mxu0
    %v411 = vadd.f32 0.0, %v410
    %412 = vdwg.mxu0
    %413 = vmatpush.msra.mxu0 %v127
    %414 = vmatpush.msra.mxu0 %v125
    %415 = vmatpush.msra.mxu0 %v123
    %416 = vmatpush.msra.mxu0 %v121
    %417 = vmatpush.msra.mxu0 %v119
    %418 = vmatpush.msra.mxu0 %v117
    %419 = vmatpush.msra.mxu0 %v115
    %420 = vmatpush.msra.mxu0 %v113
    %421 = vmatpush.msra.mxu0 %v111
    %422 = vmatpush.msra.mxu0 %v109
    %423 = vmatpush.msra.mxu0 %v107
    %424 = vmatpush.msra.mxu0 %v105
    %425 = vmatpush.msra.mxu0 %v103
    %426 = vmatpush.msra.mxu0 %v101
    %427 = vmatpush.msra.mxu0 %v99
    %428 = vmatpush.msra.mxu0 %v97
    %429 = vmatmul.f32.gmra.mxu0 %v262
    %v430 = vpop.f32.mrf.mxu0
    %v431 = vadd.f32 %v411, %v430
    %432 = vdwg.mxu0
    %433 = vmatpush.msra.mxu0 %v159
    %434 = vmatpush.msra.mxu0 %v157
    %435 = vmatpush.msra.mxu0 %v155
    %436 = vmatpush.msra.mxu0 %v153
    %437 = vmatpush.msra.mxu0 %v151
    %438 = vmatpush.msra.mxu0 %v149
    %439 = vmatpush.msra.mxu0 %v147
    %440 = vmatpush.msra.mxu0 %v145
    %441 = vmatpush.msra.mxu0 %v143
    %442 = vmatpush.msra.mxu0 %v141
    %443 = vmatpush.msra.mxu0 %v139
    %444 = vmatpush.msra.mxu0 %v137
    %445 = vmatpush.msra.mxu0 %v135
    %446 = vmatpush.msra.mxu0 %v133
    %447 = vmatpush.msra.mxu0 %v131
    %448 = vmatpush.msra.mxu0 %v129
    %449 = vmatmul.f32.gmra.mxu0 %v263
    %v450 = vpop.f32.mrf.mxu0
    %v451 = vadd.f32 %v431, %v450
    %452 = vdwg.mxu0
    %453 = vmatpush.msra.mxu0 %v191
    %454 = vmatpush.msra.mxu0 %v189
    %455 = vmatpush.msra.mxu0 %v187
    %456 = vmatpush.msra.mxu0 %v185
    %457 = vmatpush.msra.mxu0 %v183
    %458 = vmatpush.msra.mxu0 %v181
    %459 = vmatpush.msra.mxu0 %v179
    %460 = vmatpush.msra.mxu0 %v177
    %461 = vmatpush.msra.mxu0 %v175
    %462 = vmatpush.msra.mxu0 %v173
    %463 = vmatpush.msra.mxu0 %v171
    %464 = vmatpush.msra.mxu0 %v169
    %465 = vmatpush.msra.mxu0 %v167
    %466 = vmatpush.msra.mxu0 %v165
    %467 = vmatpush.msra.mxu0 %v163
    %468 = vmatpush.msra.mxu0 %v161
    %469 = vmatmul.f32.gmra.mxu0 %v264
    %v470 = vpop.f32.mrf.mxu0
    %v471 = vadd.f32 %v451, %v470
    %472 = vdwg.mxu0
    %473 = vmatpush.msra.mxu0 %v223
    %474 = vmatpush.msra.mxu0 %v221
    %475 = vmatpush.msra.mxu0 %v219
    %476 = vmatpush.msra.mxu0 %v217
    %477 = vmatpush.msra.mxu0 %v215
    %478 = vmatpush.msra.mxu0 %v213
    %479 = vmatpush.msra.mxu0 %v211
    %480 = vmatpush.msra.mxu0 %v209
    %481 = vmatpush.msra.mxu0 %v207
    %482 = vmatpush.msra.mxu0 %v205
    %483 = vmatpush.msra.mxu0 %v203
    %484 = vmatpush.msra.mxu0 %v201
    %485 = vmatpush.msra.mxu0 %v199
    %486 = vmatpush.msra.mxu0 %v197
    %487 = vmatpush.msra.mxu0 %v195
    %488 = vmatpush.msra.mxu0 %v193
    %489 = vmatmul.f32.gmra.mxu0 %v265
    %v490 = vpop.f32.mrf.mxu0
    %v491 = vadd.f32 %v471, %v490
    %492 = vdwg.mxu0
    %493 = vmatpush.msra.mxu0 %v255
    %494 = vmatpush.msra.mxu0 %v253
    %495 = vmatpush.msra.mxu0 %v251
    %496 = vmatpush.msra.mxu0 %v249
    %497 = vmatpush.msra.mxu0 %v247
    %498 = vmatpush.msra.mxu0 %v245
    %499 = vmatpush.msra.mxu0 %v243
    %500 = vmatpush.msra.mxu0 %v241
    %501 = vmatpush.msra.mxu0 %v239
    %502 = vmatpush.msra.mxu0 %v237
    %503 = vmatpush.msra.mxu0 %v235
    %504 = vmatpush.msra.mxu0 %v233
    %505 = vmatpush.msra.mxu0 %v231
    %506 = vmatpush.msra.mxu0 %v229
    %507 = vmatpush.msra.mxu0 %v227
    %508 = vmatpush.msra.mxu0 %v225
    %509 = vmatmul.f32.gmra.mxu0 %v266
    %v510 = vpop.f32.mrf.mxu0
    %v511 = vadd.f32 %v491, %v510
    %512 = vdwg.mxu0
    %v515 = vrot.slane %v511, 6
    %vm516 = vcmask 1041408
    %v517 = vsel %vm516, %v391, %v515
    %519 = vst [vmem:[#allocation8] sm:$0xf] %v517
    // Predicated region
    $region26: #{tpu_custom_call.1} parent=1 // pred_check
      _
    $region27: #{tpu_custom_call.1} parent=1 // pred_check_branch
      %521 = sbr.rel (0) target = $region29
    $region28: #{tpu_custom_call.1} parent=1 // pred_region
      %523 = vsyncadd [#allocation4], 0
      %s525 = sshll.u32 [#allocation8], 4
      %s526 = int_to_ptr.vmem [resolvable:$true] %s525
      %s527 = sshll.u32 %s3, 4
      %s528 = int_to_ptr.hbm [resolvable:$true] %s527
      %530 = dma.vmem_to_hbm [thread:$0]  %s526, 64, %s528, [#allocation4]
    $region29: #{tpu_custom_call.1} parent=1 // pred_fallthru
      _
    // Predicated region
    $region30: #{tpu_custom_call.1} parent=1 // pred_check
      _
    $region31: #{tpu_custom_call.1} parent=1 // pred_check_branch
      %532 = sbr.rel (0) target = $region33
    $region32: #{tpu_custom_call.1} parent=1 // pred_region
      %534 = dma.done [#allocation4], 64
    $region33: #{tpu_custom_call.1} parent=1 // pred_fallthru
      _
    %535 = vsyncpa [#allocation3], 1
    %536 = vsyncpa [#allocation6], 1
    %537 = vsyncpa [#allocation4], 1

</llo_original>
